<compile_context>
chip_gen: v6e
topology: v6e:2x2x1
jax: 0.10.0
libtpu: 0.0.40
codegen_flags: <defaults>
</compile_context>

<pallas_src>
import functools

import numpy as np
import jax
import jax.numpy as jnp
from jax import lax
from jax.experimental import pallas as pl
from jax.experimental.pallas import tpu as pltpu

LANE = 128   # TPU lane width
K_REL = 8    # relations processed per grid step (one sublane group)


def _round_up(x, m):
    return ((x + m - 1) // m) * m


# --------------------------------------------------------------------- fused kernel
def _relation_loss_kernel(hwl, n_valid, final_scale,
                          raf_ref, hit_ref, uv_ref, p_ref, out_ref):
    """Per-chunk RAF line integrals fused with the BCE('mean') accumulation.

    raf_ref: (K, 2*hwl) f32 — lanes [0,hwl) = x-component plane, [hwl,2*hwl) = y-component.
    hit_ref: (K, hwl)   f32 — unique-integration-point mask pre-scaled by 1/num_points.
    uv_ref : (K, 2)     f32 — unit vector (ux, uy) of obj_center - subj_center.
    p_ref  : (1, VL)    f32 — p_j = subj_score_j * obj_score_j for ALL relations (resident).
    out_ref: (1, 1)     f32 — resident accumulator; final value = loss.
    """
    i = pl.program_id(0)

    @pl.when(i == 0)
    def _init():
        out_ref[...] = jnp.zeros_like(out_ref)

    # ---- line integral for this chunk of K_REL relations -> clamped scores c (K, 1) ----
    rx = jnp.clip(raf_ref[:, :hwl], -1.0, 1.0)
    ry = jnp.clip(raf_ref[:, hwl:], -1.0, 1.0)
    ux = uv_ref[:, 0:1]                         # (K, 1) per-sublane scalars, lane-broadcast
    uy = uv_ref[:, 1:2]
    integ = jnp.sum((ux * rx + uy * ry) * hit_ref[...], axis=-1, keepdims=True)
    c = jnp.clip(integ, 0.0, 1.0)               # (K, 1)

    # ---- BCE partial sum: this chunk's c values against ALL p values -----------------
    # torch: rel[j, i] = p_j * c_i ; BCE(target=1) elem = -max(log(rel), -100); 'mean'.
    # Summation over the full V x V grid is covered exactly once across grid steps.
    rel = c * p_ref[...]                        # (K, VL): c along sublanes, p along lanes
    elem = -jnp.maximum(jnp.log(rel), -100.0)
    shape = rel.shape
    rows = i * K_REL + lax.broadcasted_iota(jnp.int32, shape, 0)   # global c index
    cols = lax.broadcasted_iota(jnp.int32, shape, 1)               # global p index
    valid = (rows < n_valid) & (cols < n_valid)
    out_ref[...] += jnp.sum(jnp.where(valid, elem, 0.0))

    @pl.when(i == pl.num_programs(0) - 1)
    def _finalize():
        out_ref[...] = out_ref[...] * final_scale


# ----------------------------------------------------------------- host-side glue
def _prepare_relations(targets, H, W):
    """Mirrors the PyTorch target parsing + np.linspace/rint/unique integration points.

    Returns (meta[V,8] int32, uv[V,2] f32, hitw[V,HWL] f32) or None if no valid relation.
    meta columns: b, scls, sy, sx, ocls, oy, ox, predicate.
    hitw[i] is the flattened (y*W+x) hit mask scaled by 1/num_unique_points,
    lane-padded to HWL = round_up(H*W, 128).
    """
    rows = []
    for b, t in enumerate(targets):
        classes = np.asarray(t["gt_classes"], dtype=np.int64)
        centers = np.asarray(t["gt_centers_int"], dtype=np.int64)    # (N, 2) in (x, y)
        relations = np.asarray(t["gt_relations"], dtype=np.int64)    # (M, 3): subj, obj, pred
        if relations.size == 0:
            continue
        cind = np.stack([classes, centers[:, 1], centers[:, 0]], axis=1)  # (cls, y, x)
        for (s, o, pr) in relations:
            rows.append([b, *cind[s], *cind[o], pr])
    if not rows:
        return None
    rels = np.asarray(rows, dtype=np.int64)           # (M, 8)
    subj_xy = rels[:, [3, 2]].astype(np.float32)      # (x, y)
    obj_xy = rels[:, [6, 5]].astype(np.float32)
    vec = obj_xy - subj_xy
    norms = np.linalg.norm(vec, axis=-1)
    valid = np.nonzero(norms)[0]                      # drop zero-norm relations
    if valid.size == 0:
        return None
    rels, vec, norms = rels[valid], vec[valid], norms[valid]
    subj_xy, obj_xy = subj_xy[valid], obj_xy[valid]
    V = valid.size
    HWL = _round_up(H * W, LANE)
    uv = (vec / norms[:, None]).astype(np.float32)    # unit vectors (ux, uy)
    hitw = np.zeros((V, HWL), dtype=np.float32)
    for i in range(V):
        pts = np.linspace(obj_xy[i], subj_xy[i], num=int(np.ceil(norms[i])))
        pts = np.rint(pts).astype(np.int32)
        pts = np.unique(pts, axis=0)                  # unique (x, y) integration points
        flat = pts[:, 1] * W + pts[:, 0]
        hitw[i, flat] = 1.0 / float(pts.shape[0])     # fold the mean-over-points factor
    meta = rels.astype(np.int32)
    return meta, uv, hitw


def relation_loss(rafs, heatmaps, targets, loss_weight=0.1):
    """Forward pass of RelationLoss (reduction='mean', ce=False)."""
    # TODO(synk): ce=True cross-entropy branch of the original module is not implemented.
    B, C2, H, W = rafs.shape
    R = C2 // 2
    prep = _prepare_relations(targets, H, W)
    if prep is None:
        return 0.0 * jnp.sum(rafs)
    meta, uv_np, hitw_np = prep
    V = meta.shape[0]
    HW = H * W
    HWL = hitw_np.shape[1]
    Vp = _round_up(V, K_REL)          # relation count padded to a multiple of 8 (sublanes)
    VL = _round_up(V, LANE)           # relation count padded to a multiple of 128 (lanes)

    b_idx = jnp.asarray(meta[:, 0], jnp.int32)
    scls = jnp.asarray(meta[:, 1], jnp.int32)
    sy = jnp.asarray(meta[:, 2], jnp.int32)
    sx = jnp.asarray(meta[:, 3], jnp.int32)
    ocls = jnp.asarray(meta[:, 4], jnp.int32)
    oy = jnp.asarray(meta[:, 5], jnp.int32)
    ox = jnp.asarray(meta[:, 6], jnp.int32)
    pred = jnp.asarray(meta[:, 7], jnp.int32)

    # ---- center-score gather in XLA: p_j = subj_score_j * obj_score_j (lane-padded row) ----
    p = (heatmaps[b_idx, scls, sy, sx] * heatmaps[b_idx, ocls, oy, ox]).astype(jnp.float32)
    p_row = jnp.zeros((1, VL), jnp.float32).at[0, :V].set(p)

    # ---- pre-gather the selected RAF planes into a contiguous lane-dense slab ----
    rafs_planes = rafs.reshape(B, R, 2, HW).astype(jnp.float32)
    raf_sel = rafs_planes[b_idx, pred]                               # (V, 2, HW)
    raf_sel = jnp.pad(raf_sel, ((0, Vp - V), (0, 0), (0, HWL - HW)))
    raf_sel = raf_sel.reshape(Vp, 2 * HWL)                           # x plane | y plane

    hitw = jnp.asarray(np.pad(hitw_np, ((0, Vp - V), (0, 0))), jnp.float32)   # (Vp, HWL)
    uv = jnp.asarray(np.pad(uv_np, ((0, Vp - V), (0, 0))), jnp.float32)       # (Vp, 2)

    loss = pl.pallas_call(
        functools.partial(_relation_loss_kernel, HWL, V,
                          float(loss_weight) / float(V * V)),
        out_shape=jax.ShapeDtypeStruct((1, 1), jnp.float32),
        grid_spec=pltpu.PrefetchScalarGridSpec(
            num_scalar_prefetch=0,
            grid=(Vp // K_REL,),
            in_specs=[pl.BlockSpec((K_REL, 2 * HWL), lambda i: (i, 0)),
                      pl.BlockSpec((K_REL, HWL), lambda i: (i, 0)),
                      pl.BlockSpec((K_REL, 2), lambda i: (i, 0)),
                      pl.BlockSpec((1, VL), lambda i: (0, 0))],     # resident p row
            out_specs=pl.BlockSpec((1, 1), lambda i: (0, 0)),       # resident accumulator
        ),
        compiler_params=pltpu.CompilerParams(dimension_semantics=("arbitrary",)),
    )(raf_sel, hitw, uv, p_row)
    return loss[0, 0]


# ------------------------------------------------------------------- NumPy reference
def relation_loss_ref(rafs, heatmaps, targets, loss_weight=0.1):
    rafs = np.asarray(rafs, np.float32)
    heatmaps = np.asarray(heatmaps, np.float32)
    B, C2, H, W = rafs.shape
    rafs5 = np.clip(rafs, -1, 1).reshape(B, C2 // 2, 2, H, W)
    rel_rows = []
    for b, t in enumerate(targets):
        classes = np.asarray(t["gt_classes"], dtype=np.int64)
        centers = np.asarray(t["gt_centers_int"], dtype=np.int64)
        relations = np.asarray(t["gt_relations"], dtype=np.int64)
        if relations.size == 0:
            continue
        cind = np.stack([classes, centers[:, 1], centers[:, 0]], axis=1)
        for (s, o, pr) in relations:
            rel_rows.append([b, *cind[s], *cind[o], pr])
    if not rel_rows:
        return 0.0
    rels = np.asarray(rel_rows, dtype=np.int64)
    subj_scores = heatmaps[rels[:, 0], rels[:, 1], rels[:, 2], rels[:, 3]]
    obj_scores = heatmaps[rels[:, 0], rels[:, 4], rels[:, 5], rels[:, 6]]
    subj_xy = rels[:, [3, 2]].astype(np.float32)
    obj_xy = rels[:, [6, 5]].astype(np.float32)
    vec = obj_xy - subj_xy
    norms = np.linalg.norm(vec, axis=-1)
    valid = np.nonzero(norms)[0]
    if valid.size == 0:
        return 0.0
    scores = []
    for i in valid:
        u = (vec[i] / norms[i]).astype(np.float32)
        pts = np.linspace(obj_xy[i], subj_xy[i], num=int(np.ceil(norms[i])))
        pts = np.rint(pts).astype(np.int32)
        pts = np.unique(pts, axis=0)
        # index batch/predicate first (basic indexing), then points -> shape (2, P),
        # matching torch's rafs[b, pred, :, ys, xs] result layout.
        per = rafs5[int(rels[i, 0]), int(rels[i, 7])][:, pts[:, 1], pts[:, 0]]  # (2, P)
        scores.append(np.float32((u @ per).mean()))
    scores = np.asarray(scores, np.float32)
    p = (subj_scores[valid] * obj_scores[valid]).astype(np.float32)
    rel_sc = p[:, None] * np.clip(scores, 0.0, 1.0)          # (V, 1) * (V,) -> (V, V)
    with np.errstate(divide="ignore"):
        elem = -np.maximum(np.log(rel_sc), -100.0)
    return float(elem.mean() * loss_weight)


# ---------------------------------------------------------------------------- main
if __name__ == "__main__":
    key = jax.random.PRNGKey(0)
    B, R, C, H, W = 2, 6, 4, 16, 16
    k1, k2 = jax.random.split(key)
    rafs = jax.random.normal(k1, (B, 2 * R, H, W), dtype=jnp.float32)
    heatmaps = jax.nn.sigmoid(jax.random.normal(k2, (B, C, H, W), dtype=jnp.float32))

    # synthetic "Instances" targets (deterministic); centers are (x, y) integers
    targets = [
        dict(gt_classes=np.array([0, 2, 1]),
             gt_centers_int=np.array([[3, 4], [12, 9], [7, 14]]),
             gt_relations=np.array([[0, 1, 2], [1, 2, 5], [2, 2, 0]])),  # last rel: zero norm -> filtered
        dict(gt_classes=np.array([3, 1]),
             gt_centers_int=np.array([[5, 5], [10, 2]]),
             gt_relations=np.array([[0, 1, 3], [1, 0, 4]])),
    ]

    loss = relation_loss(rafs, heatmaps, targets, loss_weight=0.1)
    loss = jax.block_until_ready(loss)

    ref = relation_loss_ref(np.asarray(rafs), np.asarray(heatmaps), targets, loss_weight=0.1)
    np.testing.assert_allclose(float(loss), float(ref), rtol=2e-3, atol=2e-4)
    print("KERNEL_OK")
</pallas_src>

<mosaic_0001>
module attributes {stable_mosaic.version = 11 : i64} {
  func.func @_relation_loss_kernel(%arg0: i32, %arg1: memref<8x512xf32, #tpu.memory_space<vmem>>, %arg2: memref<8x256xf32, #tpu.memory_space<vmem>>, %arg3: memref<8x2xf32, #tpu.memory_space<vmem>>, %arg4: memref<1x128xf32, #tpu.memory_space<vmem>>, %arg5: memref<1x1xf32, #tpu.memory_space<vmem>>) attributes {dimension_semantics = [#tpu.dimension_semantics<arbitrary>], iteration_bounds = array<i64: 1>, scalar_prefetch = 0 : i64, scratch_operands = 0 : i64, tpu.core_type = #tpu.core_type<tc>, window_params = [{transform_indices = @transform_0, window_bounds = array<i64: 8, 512>}, {transform_indices = @transform_1, window_bounds = array<i64: 8, 256>}, {transform_indices = @transform_2, window_bounds = array<i64: 8, 2>}, {pipeline_mode = #tpu.pipeline_mode<synchronous>, transform_indices = @transform_3, window_bounds = array<i64: 1, 128>}, {pipeline_mode = #tpu.pipeline_mode<synchronous>, transform_indices = @transform_4, window_bounds = array<i64: 1, 1>}]} {
    %c0_i32 = arith.constant 0 : i32
    %0 = arith.cmpi eq, %arg0, %c0_i32 : i32
    %1 = arith.extui %0 : i1 to i32
    %c0_i32_0 = arith.constant 0 : i32
    %2 = arith.cmpi ne, %1, %c0_i32_0 : i32
    scf.if %2 {
      %cst_27 = arith.constant 0.000000e+00 : f32
      %60 = vector.broadcast %cst_27 : f32 to vector<1x1xf32>
      %c0_28 = arith.constant 0 : index
      %c0_29 = arith.constant 0 : index
      %61 = vector.load %arg5[%c0_28, %c0_29] : memref<1x1xf32, #tpu.memory_space<vmem>>, vector<1x1xf32>
      tpu.vector_store %arg5[%c0_28, %c0_29], %60 {strides = array<i32>} : memref<1x1xf32, #tpu.memory_space<vmem>>, vector<1x1xf32>,
    } else {
    }
    %c0 = arith.constant 0 : index
    %c0_1 = arith.constant 0 : index
    %3 = vector.load %arg1[%c0, %c0_1] : memref<8x512xf32, #tpu.memory_space<vmem>>, vector<8x256xf32>
    %cst = arith.constant -1.000000e+00 : f32
    %cst_2 = arith.constant 1.000000e+00 : f32
    %4 = vector.broadcast %cst : f32 to vector<8x256xf32>
    %5 = arith.maximumf %4, %3 : vector<8x256xf32>
    %6 = vector.broadcast %cst_2 : f32 to vector<8x256xf32>
    %7 = arith.minimumf %6, %5 : vector<8x256xf32>
    %c0_3 = arith.constant 0 : index
    %c256 = arith.constant 256 : index
    %8 = vector.load %arg1[%c0_3, %c256] : memref<8x512xf32, #tpu.memory_space<vmem>>, vector<8x256xf32>
    %cst_4 = arith.constant -1.000000e+00 : f32
    %cst_5 = arith.constant 1.000000e+00 : f32
    %9 = vector.broadcast %cst_4 : f32 to vector<8x256xf32>
    %10 = arith.maximumf %9, %8 : vector<8x256xf32>
    %11 = vector.broadcast %cst_5 : f32 to vector<8x256xf32>
    %12 = arith.minimumf %11, %10 : vector<8x256xf32>
    %c0_6 = arith.constant 0 : index
    %c0_7 = arith.constant 0 : index
    %13 = vector.load %arg3[%c0_6, %c0_7] : memref<8x2xf32, #tpu.memory_space<vmem>>, vector<8x1xf32>
    %c0_8 = arith.constant 0 : index
    %c1 = arith.constant 1 : index
    %14 = vector.load %arg3[%c0_8, %c1] : memref<8x2xf32, #tpu.memory_space<vmem>>, vector<8x1xf32>
    %15 = vector.broadcast %13 : vector<8x1xf32> to vector<8x256xf32>
    %16 = arith.mulf %15, %7 : vector<8x256xf32>
    %17 = vector.broadcast %14 : vector<8x1xf32> to vector<8x256xf32>
    %18 = arith.mulf %17, %12 : vector<8x256xf32>
    %19 = arith.addf %16, %18 : vector<8x256xf32>
    %c0_9 = arith.constant 0 : index
    %c0_10 = arith.constant 0 : index
    %20 = vector.load %arg2[%c0_9, %c0_10] : memref<8x256xf32, #tpu.memory_space<vmem>>, vector<8x256xf32>
    %21 = arith.mulf %19, %20 : vector<8x256xf32>
    %cst_11 = arith.constant dense<0.000000e+00> : vector<8xf32>
    %22 = vector.multi_reduction <add>, %21, %cst_11 [1] : vector<8x256xf32> to vector<8xf32>
    %23 = vector.shape_cast %22 : vector<8xf32> to vector<8x1xf32>
    %cst_12 = arith.constant 0.000000e+00 : f32
    %cst_13 = arith.constant 1.000000e+00 : f32
    %24 = vector.broadcast %cst_12 : f32 to vector<8x1xf32>
    %25 = arith.maximumf %24, %23 : vector<8x1xf32>
    %26 = vector.broadcast %cst_13 : f32 to vector<8x1xf32>
    %27 = arith.minimumf %26, %25 : vector<8x1xf32>
    %c0_14 = arith.constant 0 : index
    %c0_15 = arith.constant 0 : index
    %28 = vector.load %arg4[%c0_14, %c0_15] : memref<1x128xf32, #tpu.memory_space<vmem>>, vector<1x128xf32>
    %29 = vector.broadcast %27 : vector<8x1xf32> to vector<8x128xf32>
    %30 = vector.broadcast %28 : vector<1x128xf32> to vector<8x128xf32>
    %31 = arith.mulf %29, %30 : vector<8x128xf32>
    %32 = math.log %31 : vector<8x128xf32>
    %cst_16 = arith.constant -1.000000e+02 : f32
    %33 = vector.broadcast %cst_16 : f32 to vector<8x128xf32>
    %34 = arith.maximumf %32, %33 : vector<8x128xf32>
    %cst_17 = arith.constant 0.000000e+00 : f32
    %35 = vector.broadcast %cst_17 : f32 to vector<8x128xf32>
    %36 = arith.subf %35, %34 : vector<8x128xf32>
    %c8_i32 = arith.constant 8 : i32
    %37 = arith.muli %arg0, %c8_i32 : i32
    %38 = tpu.iota {dimensions = array<i32: 0>} : vector<8x128xi32>
    %39 = vector.broadcast %37 : i32 to vector<8x128xi32>
    %40 = arith.addi %39, %38 : vector<8x128xi32>
    %41 = tpu.iota {dimensions = array<i32: 1>} : vector<8x128xi32>
    %c4_i32 = arith.constant 4 : i32
    %42 = vector.broadcast %c4_i32 : i32 to vector<8x128xi32>
    %43 = arith.cmpi slt, %40, %42 : vector<8x128xi32>
    %c4_i32_18 = arith.constant 4 : i32
    %44 = vector.broadcast %c4_i32_18 : i32 to vector<8x128xi32>
    %45 = arith.cmpi slt, %41, %44 : vector<8x128xi32>
    %46 = arith.andi %43, %45 : vector<8x128xi1>
    %c0_19 = arith.constant 0 : index
    %c0_20 = arith.constant 0 : index
    %47 = vector.load %arg5[%c0_19, %c0_20] : memref<1x1xf32, #tpu.memory_space<vmem>>, vector<1x1xf32>
    %cst_21 = arith.constant 0.000000e+00 : f32
    %48 = vector.broadcast %cst_21 : f32 to vector<8x128xf32>
    %49 = arith.select %46, %36, %48 : vector<8x128xi1>, vector<8x128xf32>
    %50 = vector.shape_cast %49 : vector<8x128xf32> to vector<1x8x128xf32>
    %cst_22 = arith.constant dense<0.000000e+00> : vector<1xf32>
    %51 = vector.multi_reduction <add>, %50, %cst_22 [1, 2] : vector<1x8x128xf32> to vector<1xf32>
    %52 = vector.shape_cast %51 : vector<1xf32> to vector<1x1x1xf32>
    %53 = vector.extract %52[0, 0, 0] : f32 from vector<1x1x1xf32>
    %54 = vector.broadcast %53 : f32 to vector<1x1xf32>
    %55 = arith.addf %47, %54 : vector<1x1xf32>
    %c0_23 = arith.constant 0 : index
    %c0_24 = arith.constant 0 : index
    %56 = vector.load %arg5[%c0_23, %c0_24] : memref<1x1xf32, #tpu.memory_space<vmem>>, vector<1x1xf32>
    tpu.vector_store %arg5[%c0_23, %c0_24], %55 {strides = array<i32>} : memref<1x1xf32, #tpu.memory_space<vmem>>, vector<1x1xf32>,
    %c0_i32_25 = arith.constant 0 : i32
    %57 = arith.cmpi eq, %arg0, %c0_i32_25 : i32
    %58 = arith.extui %57 : i1 to i32
    %c0_i32_26 = arith.constant 0 : i32
    %59 = arith.cmpi ne, %58, %c0_i32_26 : i32
    scf.if %59 {
      %c0_27 = arith.constant 0 : index
      %c0_28 = arith.constant 0 : index
      %60 = vector.load %arg5[%c0_27, %c0_28] : memref<1x1xf32, #tpu.memory_space<vmem>>, vector<1x1xf32>
      %cst_29 = arith.constant 6.250000e-03 : f32
      %61 = vector.broadcast %cst_29 : f32 to vector<1x1xf32>
      %62 = arith.mulf %60, %61 : vector<1x1xf32>
      %c0_30 = arith.constant 0 : index
      %c0_31 = arith.constant 0 : index
      %63 = vector.load %arg5[%c0_30, %c0_31] : memref<1x1xf32, #tpu.memory_space<vmem>>, vector<1x1xf32>
      tpu.vector_store %arg5[%c0_30, %c0_31], %62 {strides = array<i32>} : memref<1x1xf32, #tpu.memory_space<vmem>>, vector<1x1xf32>,
    } else {
    }
    return
  }
  func.func @transform_0(%arg0: i32) -> (i32, i32) {
    %c0_i32 = arith.constant 0 : i32
    %c0_i32_0 = arith.constant 0 : i32
    return %arg0, %c0_i32 : i32, i32
  }
  func.func @transform_1(%arg0: i32) -> (i32, i32) {
    %c0_i32 = arith.constant 0 : i32
    %c0_i32_0 = arith.constant 0 : i32
    return %arg0, %c0_i32 : i32, i32
  }
  func.func @transform_2(%arg0: i32) -> (i32, i32) {
    %c0_i32 = arith.constant 0 : i32
    %c0_i32_0 = arith.constant 0 : i32
    return %arg0, %c0_i32 : i32, i32
  }
  func.func @transform_3(%arg0: i32) -> (i32, i32) {
    %c0_i32 = arith.constant 0 : i32
    %c0_i32_0 = arith.constant 0 : i32
    %c0_i32_1 = arith.constant 0 : i32
    return %c0_i32, %c0_i32_0 : i32, i32
  }
  func.func @transform_4(%arg0: i32) -> (i32, i32) {
    %c0_i32 = arith.constant 0 : i32
    %c0_i32_0 = arith.constant 0 : i32
    %c0_i32_1 = arith.constant 0 : i32
    return %c0_i32, %c0_i32_0 : i32, i32
  }
}

</mosaic_0001>

<llo_original>
// kernel: tpu_custom_call.1
$region0: #{tpu_custom_call.1}
  #allocation0 [shape = 'u32[]', space=smem, size = 0x4, offset = 0x4, fixed_abs, tag = 'smem constant byte address 0x4 - core index']
  #allocation1 [shape = 'u32[144,128]{1,0:T(1,128)}', space=vmem, size = 0x12000, scoped, tag = 'internal scratch']
  %s0 = inlined_call_operand.hbm [shape: f32[8,512], index: 0, kind: input, shape index: {}]
  %s1 = inlined_call_operand.hbm [shape: f32[8,256], index: 1, kind: input, shape index: {}]
  %s2 = inlined_call_operand.vmem [shape: f32[8,2], index: 2, kind: input, shape index: {}]
  %s3 = inlined_call_operand.vmem [shape: f32[1,128], index: 3, kind: input, shape index: {}]
  %s4 = inlined_call_operand.hbm [shape: f32[1,1], index: 4, kind: output, shape index: {}]
  %s5 = sld [smem:[#allocation0]]
  $region42: #{tpu_custom_call.1} parent=0
    _
  %s7 = ssub.s32 1, %s5
  %s8 = scalar_select 0, %s7, %s5
  $region1: #{tpu_custom_call.1} parent=0
    #allocation2 [shape = 'u8[16384]{0}', space=vmem, size = 0x4000, scoped, tag = 'input window, operand 0, single buffered']
    #allocation3 [shape = 's32[1]{0}', space=sflag, size = 0x4, scoped, tag = 'scoped memory for tpu_custom_call.1']
    #allocation4 [shape = 's32[1]{0}', space=sflag, size = 0x4, scoped, tag = 'scoped memory for tpu_custom_call.1']
    #allocation5 [shape = 'u8[8192]{0}', space=vmem, size = 0x2000, scoped, tag = 'input window, operand 1, single buffered']
    #allocation6 [shape = 's32[1]{0}', space=sflag, size = 0x4, scoped, tag = 'scoped memory for tpu_custom_call.1']
    #allocation7 [shape = 'u8[512]{0}', space=vmem, size = 0x400, scoped, tag = 'output window, operand 0, single buffered']
    %9 = vsyncpa [#allocation3], 0
    %10 = vsyncpa [#allocation6], 0
    %11 = vsyncpa [#allocation4], 0
    // Predicated region
    $region2: #{tpu_custom_call.1} parent=1 // pred_check
      _
    $region3: #{tpu_custom_call.1} parent=1 // pred_check_branch
      %13 = sbr.rel (0) target = $region5
    $region4: #{tpu_custom_call.1} parent=1 // pred_region
      %s15 = ssub.s32 512, 512
      %16 = vsyncadd [#allocation3], %s15
      %s18 = sshll.u32 [#allocation2], 4
      %s19 = int_to_ptr.vmem [resolvable:$true] %s18
      %21 = dma.hbm_to_vmem [thread:$0]  %s0, 512, %s19, [#allocation3]
    $region5: #{tpu_custom_call.1} parent=1 // pred_fallthru
      _
    // Predicated region
    $region6: #{tpu_custom_call.1} parent=1 // pred_check
      _
    $region7: #{tpu_custom_call.1} parent=1 // pred_check_branch
      %23 = sbr.rel (0) target = $region9
    $region8: #{tpu_custom_call.1} parent=1 // pred_region
      %s25 = ssub.s32 256, 256
      %26 = vsyncadd [#allocation6], %s25
      %s28 = sshll.u32 [#allocation5], 4
      %s29 = int_to_ptr.vmem [resolvable:$true] %s28
      %31 = dma.hbm_to_vmem [thread:$0]  %s1, 256, %s29, [#allocation6]
    $region9: #{tpu_custom_call.1} parent=1 // pred_fallthru
      _
    // Predicated region
    $region10: #{tpu_custom_call.1} parent=1 // pred_check
      _
    $region11: #{tpu_custom_call.1} parent=1 // pred_check_branch
      %33 = sbr.rel (0) target = $region13
    $region12: #{tpu_custom_call.1} parent=1 // pred_region
      _
    $region13: #{tpu_custom_call.1} parent=1 // pred_fallthru
      _
    // Predicated region
    $region14: #{tpu_custom_call.1} parent=1 // pred_check
      _
    $region15: #{tpu_custom_call.1} parent=1 // pred_check_branch
      %35 = sbr.rel (0) target = $region17
    $region16: #{tpu_custom_call.1} parent=1 // pred_region
      _
    $region17: #{tpu_custom_call.1} parent=1 // pred_fallthru
      _
    // Predicated region
    $region18: #{tpu_custom_call.1} parent=1 // pred_check
      _
    $region19: #{tpu_custom_call.1} parent=1 // pred_check_branch
      %37 = sbr.rel (0) target = $region21
    $region20: #{tpu_custom_call.1} parent=1 // pred_region
      %38 = dma.done [#allocation3], 512
    $region21: #{tpu_custom_call.1} parent=1 // pred_fallthru
      _
    // Predicated region
    $region22: #{tpu_custom_call.1} parent=1 // pred_check
      _
    $region23: #{tpu_custom_call.1} parent=1 // pred_check_branch
      %40 = sbr.rel (0) target = $region25
    $region24: #{tpu_custom_call.1} parent=1 // pred_region
      %41 = dma.done [#allocation6], 256
    $region25: #{tpu_custom_call.1} parent=1 // pred_fallthru
      _
    %p42 = scmp.eq.s32.totalorder 0, 0
    // Predicated region
    $region26: #{tpu_custom_call.1} parent=1 // pred_check
      %p43 = pneg %p42
    $region27: #{tpu_custom_call.1} parent=1 // pred_check_branch
      %45 = sbr.rel (%p43) target = $region29
    $region28: #{tpu_custom_call.1} parent=1 // pred_region
      %vm46 = vcmask 0
      %47 = vst.msk [vmem:[#allocation7] sm:$0x1] %vm46, 0.0
    $region29: #{tpu_custom_call.1} parent=1 // pred_fallthru
      _
    %v48 = vld [vmem:[#allocation2] sm:$0xff]
    %v49 = vld [vmem:[#allocation2 + $0x8] sm:$0xff]
    %v50 = vmax.f32 %v48, -1.0
    %v51 = vmax.f32 %v49, -1.0
    %v52 = vmin.f32 %v50, 1.0
    %v53 = vmin.f32 %v51, 1.0
    %v54 = vld [vmem:[#allocation2 + $0x10] sm:$0xff]
    %v55 = vld [vmem:[#allocation2 + $0x18] sm:$0xff]
    %v56 = vmax.f32 %v54, -1.0
    %v57 = vmax.f32 %v55, -1.0
    %v58 = vmin.f32 %v56, 1.0
    %v59 = vmin.f32 %v57, 1.0
    %v60 = vld [vmem:[%s2] sm:$0xff]
    %62 = vset.pattern.permute.xlu0 0
    %63 = vperm.xlu0 %62, %v60
    %v64 = vpop.permute.xlu0 %63
    %v66 = vmul.f32 %v64, %v52
    %v67 = vmul.f32 %v64, %v53
    %68 = vset.pattern.permute.xlu0 1
    %69 = vperm.xlu0 %68, %v60
    %v70 = vpop.permute.xlu0 %69
    %v72 = vmul.f32 %v70, %v58
    %v73 = vmul.f32 %v70, %v59
    %v74 = vadd.f32 %v66, %v72
    %v75 = vadd.f32 %v67, %v73
    %v76 = vld [vmem:[#allocation5] sm:$0xff]
    %v77 = vld [vmem:[#allocation5 + $0x8] sm:$0xff]
    %v78 = vmul.f32 %v74, %v76
    %v79 = vmul.f32 %v75, %v77
    %v80 = vadd.f32 %v78, %v79
    %81 = vadd.xlane.f32.xlu0 %v80
    %v82 = vpop.xlane.xlu0 %81
    %v83 = vmax.f32 %v82, 0.0
    %v84 = vmin.f32 %v83, 1.0
    %v85 = vld [vmem:[%s3] sm:$0x1]
    %v87 = vlaneseq
    %v88 = vshrl.u32 %v87, 7
    %v89 = vsub.s32 0, %v88
    %v90 = vrot.slane %v85, %v89
    %v92 = vmul.f32 %v84, %v90
    %v93 = vlog2.pop %v92
    %v94 = vmul.f32 %v93, 0.6931472
    %v95 = vmax.f32 %v94, -100.0
    %v96 = vsub.f32 0.0, %v95
    %s97 = smul.u32 0, 8
    %v98 = vlaneseq
    %v99 = vshrl.u32 %v98, 7
    %v100 = vstv %s97
    %v101 = vadd.s32 %v100, %v99
    %v102 = vlaneseq
    %v103 = vand.u32 %v102, 127
    %vm104 = vcmp.lt.s32.totalorder %v101, 4
    %vm105 = vcmp.lt.s32.totalorder %v103, 4
    %vm106 = vmand %vm104, %vm105
    %v107 = vld [vmem:[#allocation7] sm:$0x1]
    %v108 = vsel %vm106, %v96, 0.0
    %109 = vadd.xlane.f32.xlu0 %v108
    %v110 = vpop.xlane.xlu0 %109
    %v111 = vrot.slane %v110, 4
    %v112 = vadd.f32 %v110, %v111
    %v113 = vrot.slane %v112, 2
    %v114 = vadd.f32 %v112, %v113
    %v115 = vrot.slane %v114, 1
    %v116 = vadd.f32 %v114, %v115
    %s117 = vtos %v116
    %v118 = vstv %s117
    %v119 = vadd.f32 %v107, %v118
    %vm120 = vcmask 0
    %121 = vst.msk [vmem:[#allocation7] sm:$0x1] %vm120, %v119
    // Predicated region
    $region30: #{tpu_custom_call.1} parent=1 // pred_check
      %p122 = pneg %p42
    $region31: #{tpu_custom_call.1} parent=1 // pred_check_branch
      %124 = sbr.rel (%p122) target = $region33
    $region32: #{tpu_custom_call.1} parent=1 // pred_region
      %v125 = vld [vmem:[#allocation7] sm:$0x1]
      %v126 = vmul.f32 %v125, 0.00625
      %127 = vst.msk [vmem:[#allocation7] sm:$0x1] %vm120, %v126
    $region33: #{tpu_custom_call.1} parent=1 // pred_fallthru
      _
    // Predicated region
    $region34: #{tpu_custom_call.1} parent=1 // pred_check
      _
    $region35: #{tpu_custom_call.1} parent=1 // pred_check_branch
      %129 = sbr.rel (0) target = $region37
    $region36: #{tpu_custom_call.1} parent=1 // pred_region
      %s131 = ssub.s32 16, 16
      %132 = vsyncadd [#allocation4], %s131
      %s134 = sshll.u32 [#allocation7], 4
      %s135 = int_to_ptr.vmem [resolvable:$true] %s134
      %137 = dma.vmem_to_hbm [thread:$0]  %s135, 16, %s4, [#allocation4]
    $region37: #{tpu_custom_call.1} parent=1 // pred_fallthru
      _
    // Predicated region
    $region38: #{tpu_custom_call.1} parent=1 // pred_check
      _
    $region39: #{tpu_custom_call.1} parent=1 // pred_check_branch
      %139 = sbr.rel (0) target = $region41
    $region40: #{tpu_custom_call.1} parent=1 // pred_region
      %140 = dma.done [#allocation4], 16
    $region41: #{tpu_custom_call.1} parent=1 // pred_fallthru
      _
    %141 = vsyncpa [#allocation3], 1
    %142 = vsyncpa [#allocation6], 1
    %143 = vsyncpa [#allocation4], 1

</llo_original>
